<compile_context>
chip_gen: v5e
topology: v5e:2x2
jax: 0.10.0
libtpu: 0.0.40
codegen_flags: <defaults>
</compile_context>

<pallas_src>
import functools

import jax
import jax.numpy as jnp
from jax.experimental import pallas as pl
from jax.experimental.pallas import tpu as pltpu

# ----------------------- small, module-consistent config -----------------------
B = 2            # batch
CB = 32          # backbone_output_dims
HF, WF = 16, 16  # backbone feature-map spatial size
HIDDEN = 32      # attn_dim / hidden_dim
NUM_Q = 8        # num_queries
NUM_CLS = 3      # num_cls
LSP_DIM = 8      # lsp_dim  (specific head outputs lsp_dim - 4)
DEC_LAYERS = 2   # number of decoder layers (leading dim of hs)

# Full-array-resident-in-VMEM spec (no grid, no tiling).
_VMEM = pl.BlockSpec(memory_space=pltpu.MemorySpace.VMEM)


# --------------------------------- kernels -------------------------------------
def bn_proj_kernel(x_ref, scale_ref, shift_ref, w_ref, b_ref, norm_ref, proj_ref):
    """Fused FrozenBatchNorm2d + 1x1-conv input projection.

    x:      [B, C, H*W]   (channels on sublanes, spatial on the 128-lane axis)
    scale:  [1, C, 1]     shift: [1, C, 1]
    w:      [hid, C]      b: [1, hid, 1]
    norm:   [B, C, H*W]   proj: [B, hid, H*W]
    """
    x = x_ref[...]

    # FrozenBatchNorm2d:  x * scale + shift  (per-channel, broadcast along lanes).
    norm_ref[...] = x * scale_ref[...] + shift_ref[...]

    # lane_input_proj (1x1 conv) on the RAW feature, as in the original forward.
    # Batched matmul on the MXU, lane-dense (H*W = 256) output rows, single store.
    proj_ref[...] = (
        jnp.einsum("oc,bcn->bon", w_ref[...], x, preferred_element_type=jnp.float32)
        + b_ref[...]
    )


def lane_heads_kernel(x_ref, w1_ref, b1_ref, w2_ref, b2_ref, avg_ref, shmask_ref,
                      out_ref, *, hd):
    """Fused lane_class_embed / lane_specific_embed / lane_shared_embed heads.

    x:      [N, D]              N = dec_layers * batch * num_queries
    w1:     [D, 2*hd + ncls]    columns = [ws1 | wh1 | wc],  b1: [1, 2*hd + ncls]
    w2:     [2*hd, lsp]         columns pre-ordered to the final curve layout
                                [spec0 spec1 sh0 sh1 sh2 sh3 spec2 spec3]
    b2:     [1, lsp]            same column order
    avg:    [N, N]              block-diagonal 1/Q averaging matrix per (layer,batch) group
    shmask: [1, lsp]            1.0 on the 4 shared columns, 0.0 on the specific ones
    out:    [N, ncls + lsp]     packed [class logits | curves]
    """
    x = x_ref[...]

    # Stage 1: all three first-layer matmuls in one MXU call.
    s1 = jnp.dot(x, w1_ref[...], preferred_element_type=jnp.float32) + b1_ref[...]
    h = jnp.maximum(s1[:, :2 * hd], 0.0)        # [relu(spec hidden) | relu(shared hidden)]
    logits = s1[:, 2 * hd:]                     # lane_class_embed output  [N, ncls]

    # Stage 2: both second-layer matmuls in one block matmul, columns already in the
    # final curve order -> no lane-concat re-ordering afterwards.
    s2 = jnp.dot(h, w2_ref[...], preferred_element_type=jnp.float32) + b2_ref[...]

    # torch.mean(shared, dim=-2, keepdim=True).repeat(...) == block-averaging matmul
    # (avg rows sum to 1, so the bias term is preserved).  Select shared columns by mask.
    s2_avg = jnp.dot(avg_ref[...], s2, preferred_element_type=jnp.float32)
    curves = s2 + (s2_avg - s2) * shmask_ref[...]

    out_ref[...] = jnp.concatenate([logits, curves], axis=-1)   # single packed store


# --------------------------------- wrappers -------------------------------------
@jax.jit
def fused_bn_input_proj(p_nchw, fbn_w, fbn_b, fbn_rm, fbn_rv, proj_w, proj_b, eps=1e-5):
    """Returns (FrozenBatchNorm2d(p), lane_input_proj(p)) with a single pass over p."""
    b, c, h, w = p_nchw.shape
    hid = proj_w.shape[0]

    scale = fbn_w * jax.lax.rsqrt(fbn_rv + eps)
    shift = fbn_b - fbn_rm * scale

    x = p_nchw.reshape(b, c, h * w)              # free reshape: C on sublanes, H*W on lanes

    norm, proj = pl.pallas_call(
        bn_proj_kernel,
        out_shape=(jax.ShapeDtypeStruct((b, c, h * w), jnp.float32),
                   jax.ShapeDtypeStruct((b, hid, h * w), jnp.float32)),
        in_specs=[_VMEM] * 5,
        out_specs=(_VMEM, _VMEM),
    )(x, scale.reshape(1, c, 1), shift.reshape(1, c, 1),
      proj_w, proj_b.reshape(1, hid, 1))

    return norm.reshape(b, c, h, w), proj.reshape(b, hid, h, w)


@jax.jit
def lane_heads(hs, params):
    """Prediction heads on hs: returns (output_class, output_specific) like the module."""
    l, b, q, d = hs.shape
    n = l * b * q
    ncls = params["wc"].shape[1]
    hd = params["ws1"].shape[1]
    nsp = params["ws2"].shape[1]                 # lsp_dim - 4
    lsp = nsp + 4

    x = hs.reshape(n, d)

    # Stage-1 fused weight: columns = [ws1 | wh1 | wc].
    w1 = jnp.concatenate([params["ws1"], params["wh1"], params["wc"]], axis=1)
    b1 = jnp.concatenate([params["bs1"], params["bh1"], params["bc"]]).reshape(1, -1)

    # Stage-2 fused weight, columns pre-ordered to the final curve layout
    # [spec[:, :2] | shared(4) | spec[:, 2:]]  (ws2 on rows :hd, wh2 on rows hd:).
    w2 = jnp.zeros((2 * hd, lsp), jnp.float32)
    w2 = w2.at[:hd, 0:2].set(params["ws2"][:, :2])
    w2 = w2.at[:hd, 6:].set(params["ws2"][:, 2:])
    w2 = w2.at[hd:, 2:6].set(params["wh2"])
    b2 = jnp.zeros((lsp,), jnp.float32)
    b2 = b2.at[0:2].set(params["bs2"][:2])
    b2 = b2.at[6:].set(params["bs2"][2:])
    b2 = b2.at[2:6].set(params["bh2"])
    b2 = b2.reshape(1, -1)

    # Mask selecting the 4 shared-head columns of the curve layout.
    shmask = jnp.zeros((1, lsp), jnp.float32).at[:, 2:6].set(1.0)

    # Block-averaging matrix: mean over the Q queries of each (layer, batch) group.
    group = jnp.repeat(jnp.arange(l * b), q)
    avg = (group[:, None] == group[None, :]).astype(jnp.float32) / q

    packed = pl.pallas_call(
        functools.partial(lane_heads_kernel, hd=hd),
        out_shape=jax.ShapeDtypeStruct((n, ncls + lsp), jnp.float32),
        in_specs=[_VMEM] * 7,
        out_specs=_VMEM,
    )(x, w1, b1, w2, b2, avg, shmask)

    packed = packed.reshape(l, b, q, ncls + lsp)
    return packed[..., :ncls], packed[..., ncls:]


# ------------------------------ pure-JAX references -----------------------------
def bn_proj_ref(p, fbn_w, fbn_b, fbn_rm, fbn_rv, proj_w, proj_b, eps=1e-5):
    scale = fbn_w * jax.lax.rsqrt(fbn_rv + eps)
    shift = fbn_b - fbn_rm * scale
    norm = p * scale[None, :, None, None] + shift[None, :, None, None]
    proj = jnp.einsum("oc,bchw->bohw", proj_w, p) + proj_b[None, :, None, None]
    return norm, proj


def lane_heads_ref(hs, p):
    cls = hs @ p["wc"] + p["bc"]
    spec = jnp.maximum(hs @ p["ws1"] + p["bs1"], 0.0) @ p["ws2"] + p["bs2"]
    shr = jnp.maximum(hs @ p["wh1"] + p["bh1"], 0.0) @ p["wh2"] + p["bh2"]
    shr = jnp.mean(shr, axis=-2, keepdims=True)
    shr = jnp.broadcast_to(shr, spec.shape[:-1] + (4,))
    curves = jnp.concatenate([spec[..., :2], shr, spec[..., 2:]], axis=-1)
    return cls, curves


# ----------------------------------- main ---------------------------------------
if __name__ == "__main__":
    key = jax.random.PRNGKey(0)
    ks = jax.random.split(key, 16)

    # Backbone feature `p` (last stage of the MiT encoder) -- synthetic input.
    p = jax.random.normal(ks[0], (B, CB, HF, WF), dtype=jnp.float32)

    # FrozenBatchNorm2d buffers (as initialized in the module: ones/zeros).
    fbn_w = jnp.ones((CB,), jnp.float32)
    fbn_b = jnp.zeros((CB,), jnp.float32)
    fbn_rm = jnp.zeros((CB,), jnp.float32)
    fbn_rv = jnp.ones((CB,), jnp.float32)

    # lane_input_proj (1x1 conv) parameters, PyTorch layout (out_ch, in_ch).
    proj_w = 0.05 * jax.random.normal(ks[1], (HIDDEN, CB), dtype=jnp.float32)
    proj_b = 0.01 * jax.random.normal(ks[2], (HIDDEN,), dtype=jnp.float32)

    # Query embeddings and synthetic transformer-decoder output `hs`
    # (shape [dec_layers, B, num_queries, hidden_dim]).
    query_embed = jax.random.normal(ks[3], (NUM_Q, HIDDEN), dtype=jnp.float32)
    hs = (query_embed[None, None, :, :]
          + 0.1 * jax.random.normal(ks[4], (DEC_LAYERS, B, NUM_Q, HIDDEN),
                                    dtype=jnp.float32))

    # Head parameters.
    head_params = {
        "wc": 0.1 * jax.random.normal(ks[5], (HIDDEN, NUM_CLS), jnp.float32),
        "bc": 0.01 * jax.random.normal(ks[6], (NUM_CLS,), jnp.float32),
        "ws1": 0.1 * jax.random.normal(ks[7], (HIDDEN, HIDDEN), jnp.float32),
        "bs1": 0.01 * jax.random.normal(ks[8], (HIDDEN,), jnp.float32),
        "ws2": 0.1 * jax.random.normal(ks[9], (HIDDEN, LSP_DIM - 4), jnp.float32),
        "bs2": 0.01 * jax.random.normal(ks[10], (LSP_DIM - 4,), jnp.float32),
        "wh1": 0.1 * jax.random.normal(ks[11], (HIDDEN, HIDDEN), jnp.float32),
        "bh1": 0.01 * jax.random.normal(ks[12], (HIDDEN,), jnp.float32),
        "wh2": 0.1 * jax.random.normal(ks[13], (HIDDEN, 4), jnp.float32),
        "bh2": 0.01 * jax.random.normal(ks[14], (4,), jnp.float32),
    }

    # --- FrozenBatchNorm2d + lane_input_proj(p), fused: one pass over p ---
    p_norm, proj = fused_bn_input_proj(p, fbn_w, fbn_b, fbn_rm, fbn_rv, proj_w, proj_b)

    # TODO(synk): lane_transformer(proj, pmasks, query_embed, pos) is an external
    # module (build_transformer); `hs` above stands in for its output.

    # --- prediction heads + mean/repeat/concat (one fused Pallas kernel) ---
    output_class, output_specific = lane_heads(hs, head_params)

    out = {
        "pred_logits": output_class[-1],
        "pred_curves": output_specific[-1],
        "aux_outputs": [
            {"pred_logits": a, "pred_curves": b}
            for a, b in zip(output_class[:-1], output_specific[:-1])
        ],
    }

    # Block on results and verify against pure-JAX references.
    jax.block_until_ready((p_norm, proj, output_class, output_specific))

    norm_ref, proj_ref = bn_proj_ref(p, fbn_w, fbn_b, fbn_rm, fbn_rv, proj_w, proj_b)
    ref_cls, ref_curves = lane_heads_ref(hs, head_params)

    assert jnp.allclose(p_norm, norm_ref, atol=1e-4, rtol=1e-4)
    assert jnp.allclose(proj, proj_ref, atol=1e-3, rtol=1e-3)
    assert jnp.allclose(output_class, ref_cls, atol=1e-4, rtol=1e-4)
    assert jnp.allclose(output_specific, ref_curves, atol=1e-4, rtol=1e-4)
    assert out["pred_logits"].shape == (B, NUM_Q, NUM_CLS)
    assert out["pred_curves"].shape == (B, NUM_Q, LSP_DIM)
    assert len(out["aux_outputs"]) == DEC_LAYERS - 1
    assert proj.shape == (B, HIDDEN, HF, WF)
    assert p_norm.shape == (B, CB, HF, WF)

    print("KERNEL_OK")
</pallas_src>

<mosaic_0001>
module attributes {stable_mosaic.version = 11 : i64} {
  func.func @bn_proj_kernel(%arg0: memref<2x32x256xf32, #tpu.memory_space<vmem>>, %arg1: memref<1x32x1xf32, #tpu.memory_space<vmem>>, %arg2: memref<1x32x1xf32, #tpu.memory_space<vmem>>, %arg3: memref<32x32xf32, #tpu.memory_space<vmem>>, %arg4: memref<1x32x1xf32, #tpu.memory_space<vmem>>, %arg5: memref<2x32x256xf32, #tpu.memory_space<vmem>>, %arg6: memref<2x32x256xf32, #tpu.memory_space<vmem>>) attributes {dimension_semantics = [], scalar_prefetch = 0 : i64, scratch_operands = 0 : i64, tpu.core_type = #tpu.core_type<tc>} {
    %c0 = arith.constant 0 : index
    %c0_0 = arith.constant 0 : index
    %c0_1 = arith.constant 0 : index
    %0 = vector.load %arg0[%c0, %c0_0, %c0_1] : memref<2x32x256xf32, #tpu.memory_space<vmem>>, vector<2x32x256xf32>
    %c0_2 = arith.constant 0 : index
    %c0_3 = arith.constant 0 : index
    %c0_4 = arith.constant 0 : index
    %1 = vector.load %arg1[%c0_2, %c0_3, %c0_4] : memref<1x32x1xf32, #tpu.memory_space<vmem>>, vector<1x32x1xf32>
    %2 = vector.broadcast %1 : vector<1x32x1xf32> to vector<2x32x256xf32>
    %3 = arith.mulf %0, %2 : vector<2x32x256xf32>
    %c0_5 = arith.constant 0 : index
    %c0_6 = arith.constant 0 : index
    %c0_7 = arith.constant 0 : index
    %4 = vector.load %arg2[%c0_5, %c0_6, %c0_7] : memref<1x32x1xf32, #tpu.memory_space<vmem>>, vector<1x32x1xf32>
    %5 = vector.broadcast %4 : vector<1x32x1xf32> to vector<2x32x256xf32>
    %6 = arith.addf %3, %5 : vector<2x32x256xf32>
    %c0_8 = arith.constant 0 : index
    %c0_9 = arith.constant 0 : index
    %c0_10 = arith.constant 0 : index
    %7 = vector.load %arg5[%c0_8, %c0_9, %c0_10] : memref<2x32x256xf32, #tpu.memory_space<vmem>>, vector<2x32x256xf32>
    tpu.vector_store %arg5[%c0_8, %c0_9, %c0_10], %6 {strides = array<i32>} : memref<2x32x256xf32, #tpu.memory_space<vmem>>, vector<2x32x256xf32>,
    %c0_11 = arith.constant 0 : index
    %c0_12 = arith.constant 0 : index
    %8 = vector.load %arg3[%c0_11, %c0_12] : memref<32x32xf32, #tpu.memory_space<vmem>>, vector<32x32xf32>
    "tpu.trace_start"() <{level = 10 : i32, message = "oc,bcn->bon"}> : () -> ()
    %cst = arith.constant dense<0.000000e+00> : vector<2x256x32xf32>
    %9 = tpu.matmul %0, %8, %cst {dimension_numbers = #tpu.dot_dimension_numbers<[1], [1], [0, 2], [0], [0, 0, 0, 2, 1, 0], [], []>} : vector<2x32x256xf32>, vector<32x32xf32>, vector<2x256x32xf32> -> vector<2x256x32xf32>
    %10 = tpu.transpose %9, [0, 2, 1] : vector<2x256x32xf32> -> vector<2x32x256xf32>
    "tpu.trace_stop"() : () -> ()
    %c0_13 = arith.constant 0 : index
    %c0_14 = arith.constant 0 : index
    %c0_15 = arith.constant 0 : index
    %11 = vector.load %arg4[%c0_13, %c0_14, %c0_15] : memref<1x32x1xf32, #tpu.memory_space<vmem>>, vector<1x32x1xf32>
    %12 = vector.broadcast %11 : vector<1x32x1xf32> to vector<2x32x256xf32>
    %13 = arith.addf %10, %12 : vector<2x32x256xf32>
    %c0_16 = arith.constant 0 : index
    %c0_17 = arith.constant 0 : index
    %c0_18 = arith.constant 0 : index
    %14 = vector.load %arg6[%c0_16, %c0_17, %c0_18] : memref<2x32x256xf32, #tpu.memory_space<vmem>>, vector<2x32x256xf32>
    tpu.vector_store %arg6[%c0_16, %c0_17, %c0_18], %13 {strides = array<i32>} : memref<2x32x256xf32, #tpu.memory_space<vmem>>, vector<2x32x256xf32>,
    return
  }
}

</mosaic_0001>

<llo_original>
// kernel: fused_bn_input_proj.1
$region0: #{fused_bn_input_proj.1}
  #allocation0 [shape = 'u32[]', space=smem, size = 0x4, offset = 0x4, fixed_abs, tag = 'smem constant byte address 0x4 - core index']
  #allocation1 [shape = 'u32[72,128]{1,0:T(1,128)}', space=vmem, size = 0x9000, scoped, tag = 'internal scratch']
  %s0 = inlined_call_operand.vmem [shape: f32[2,32,256], index: 0, kind: input, shape index: {}]
  %s1 = inlined_call_operand.vmem [shape: f32[1,32,1], index: 1, kind: input, shape index: {}]
  %s2 = inlined_call_operand.vmem [shape: f32[1,32,1], index: 2, kind: input, shape index: {}]
  %s3 = inlined_call_operand.vmem [shape: f32[32,32], index: 3, kind: input, shape index: {}]
  %s4 = inlined_call_operand.vmem [shape: f32[1,32,1], index: 4, kind: input, shape index: {}]
  %s5 = inlined_call_operand.vmem [shape: f32[2,32,256], index: 5, kind: output, shape index: {0}]
  %s6 = inlined_call_operand.vmem [shape: f32[2,32,256], index: 6, kind: output, shape index: {1}]
  %7 = xla_tuple %s5, %s6
  %s8 = sld [smem:[#allocation0]]
  $region38: #{fused_bn_input_proj.1} parent=0
    _
  %s10 = ssub.s32 1, %s8
  %s11 = scalar_select 0, %s10, %s8
  // Predicated region
  $region2: #{fused_bn_input_proj.1} parent=0 // pred_check
    _
  $region3: #{fused_bn_input_proj.1} parent=0 // pred_check_branch
    %13 = sbr.rel (0) target = $region5
  $region4: #{fused_bn_input_proj.1} parent=0 // pred_region
    _
  $region5: #{fused_bn_input_proj.1} parent=0 // pred_fallthru
    _
  // Predicated region
  $region6: #{fused_bn_input_proj.1} parent=0 // pred_check
    _
  $region7: #{fused_bn_input_proj.1} parent=0 // pred_check_branch
    %15 = sbr.rel (0) target = $region9
  $region8: #{fused_bn_input_proj.1} parent=0 // pred_region
    _
  $region9: #{fused_bn_input_proj.1} parent=0 // pred_fallthru
    _
  // Predicated region
  $region10: #{fused_bn_input_proj.1} parent=0 // pred_check
    _
  $region11: #{fused_bn_input_proj.1} parent=0 // pred_check_branch
    %17 = sbr.rel (0) target = $region13
  $region12: #{fused_bn_input_proj.1} parent=0 // pred_region
    _
  $region13: #{fused_bn_input_proj.1} parent=0 // pred_fallthru
    _
  // Predicated region
  $region14: #{fused_bn_input_proj.1} parent=0 // pred_check
    _
  $region15: #{fused_bn_input_proj.1} parent=0 // pred_check_branch
    %19 = sbr.rel (0) target = $region17
  $region16: #{fused_bn_input_proj.1} parent=0 // pred_region
    _
  $region17: #{fused_bn_input_proj.1} parent=0 // pred_fallthru
    _
  // Predicated region
  $region18: #{fused_bn_input_proj.1} parent=0 // pred_check
    _
  $region19: #{fused_bn_input_proj.1} parent=0 // pred_check_branch
    %21 = sbr.rel (0) target = $region21
  $region20: #{fused_bn_input_proj.1} parent=0 // pred_region
    _
  $region21: #{fused_bn_input_proj.1} parent=0 // pred_fallthru
    _
  %v22 = vld [vmem:[%s0] sm:$0xff]
  %v23 = vld [vmem:[%s0 + $0x8] sm:$0xff]
  %v24 = vld [vmem:[%s0 + $0x10] sm:$0xff]
  %v25 = vld [vmem:[%s0 + $0x18] sm:$0xff]
  %v26 = vld [vmem:[%s0 + $0x20] sm:$0xff]
  %v27 = vld [vmem:[%s0 + $0x28] sm:$0xff]
  %v28 = vld [vmem:[%s0 + $0x30] sm:$0xff]
  %v29 = vld [vmem:[%s0 + $0x38] sm:$0xff]
  %v30 = vld [vmem:[%s0 + $0x40] sm:$0xff]
  %v31 = vld [vmem:[%s0 + $0x48] sm:$0xff]
  %v32 = vld [vmem:[%s0 + $0x50] sm:$0xff]
  %v33 = vld [vmem:[%s0 + $0x58] sm:$0xff]
  %v34 = vld [vmem:[%s0 + $0x60] sm:$0xff]
  %v35 = vld [vmem:[%s0 + $0x68] sm:$0xff]
  %v36 = vld [vmem:[%s0 + $0x70] sm:$0xff]
  %v37 = vld [vmem:[%s0 + $0x78] sm:$0xff]
  %v38 = vld [vmem:[%s1] sm:$0xff]
  %v39 = vld [vmem:[%s1 + $0x8] sm:$0xff]
  %v40 = vld [vmem:[%s1 + $0x10] sm:$0xff]
  %v41 = vld [vmem:[%s1 + $0x18] sm:$0xff]
  %43 = vset.pattern.permute.xlu0 0
  %44 = vperm.xlu0 %43, %v38
  %v45 = vpop.permute.xlu0 %44
  %48 = vset.pattern.permute.xlu0 0
  %49 = vperm.xlu0 %48, %v39
  %v50 = vpop.permute.xlu0 %49
  %53 = vset.pattern.permute.xlu0 0
  %54 = vperm.xlu0 %53, %v40
  %v55 = vpop.permute.xlu0 %54
  %58 = vset.pattern.permute.xlu0 0
  %59 = vperm.xlu0 %58, %v41
  %v60 = vpop.permute.xlu0 %59
  %v62 = vmul.f32 %v22, %v45
  %v63 = vmul.f32 %v23, %v45
  %v64 = vmul.f32 %v24, %v50
  %v65 = vmul.f32 %v25, %v50
  %v66 = vmul.f32 %v26, %v55
  %v67 = vmul.f32 %v27, %v55
  %v68 = vmul.f32 %v28, %v60
  %v69 = vmul.f32 %v29, %v60
  %v70 = vmul.f32 %v30, %v45
  %v71 = vmul.f32 %v31, %v45
  %v72 = vmul.f32 %v32, %v50
  %v73 = vmul.f32 %v33, %v50
  %v74 = vmul.f32 %v34, %v55
  %v75 = vmul.f32 %v35, %v55
  %v76 = vmul.f32 %v36, %v60
  %v77 = vmul.f32 %v37, %v60
  %v78 = vld [vmem:[%s2] sm:$0xff]
  %v79 = vld [vmem:[%s2 + $0x8] sm:$0xff]
  %v80 = vld [vmem:[%s2 + $0x10] sm:$0xff]
  %v81 = vld [vmem:[%s2 + $0x18] sm:$0xff]
  %83 = vset.pattern.permute.xlu0 0
  %84 = vperm.xlu0 %83, %v78
  %v85 = vpop.permute.xlu0 %84
  %88 = vset.pattern.permute.xlu0 0
  %89 = vperm.xlu0 %88, %v79
  %v90 = vpop.permute.xlu0 %89
  %93 = vset.pattern.permute.xlu0 0
  %94 = vperm.xlu0 %93, %v80
  %v95 = vpop.permute.xlu0 %94
  %98 = vset.pattern.permute.xlu0 0
  %99 = vperm.xlu0 %98, %v81
  %v100 = vpop.permute.xlu0 %99
  %v102 = vadd.f32 %v62, %v85
  %v103 = vadd.f32 %v63, %v85
  %v104 = vadd.f32 %v64, %v90
  %v105 = vadd.f32 %v65, %v90
  %v106 = vadd.f32 %v66, %v95
  %v107 = vadd.f32 %v67, %v95
  %v108 = vadd.f32 %v68, %v100
  %v109 = vadd.f32 %v69, %v100
  %v110 = vadd.f32 %v70, %v85
  %v111 = vadd.f32 %v71, %v85
  %v112 = vadd.f32 %v72, %v90
  %v113 = vadd.f32 %v73, %v90
  %v114 = vadd.f32 %v74, %v95
  %v115 = vadd.f32 %v75, %v95
  %v116 = vadd.f32 %v76, %v100
  %v117 = vadd.f32 %v77, %v100
  %118 = vst [vmem:[%s5] sm:$0xff] %v102
  %119 = vst [vmem:[%s5 + $0x8] sm:$0xff] %v103
  %120 = vst [vmem:[%s5 + $0x10] sm:$0xff] %v104
  %121 = vst [vmem:[%s5 + $0x18] sm:$0xff] %v105
  %122 = vst [vmem:[%s5 + $0x20] sm:$0xff] %v106
  %123 = vst [vmem:[%s5 + $0x28] sm:$0xff] %v107
  %124 = vst [vmem:[%s5 + $0x30] sm:$0xff] %v108
  %125 = vst [vmem:[%s5 + $0x38] sm:$0xff] %v109
  %126 = vst [vmem:[%s5 + $0x40] sm:$0xff] %v110
  %127 = vst [vmem:[%s5 + $0x48] sm:$0xff] %v111
  %128 = vst [vmem:[%s5 + $0x50] sm:$0xff] %v112
  %129 = vst [vmem:[%s5 + $0x58] sm:$0xff] %v113
  %130 = vst [vmem:[%s5 + $0x60] sm:$0xff] %v114
  %131 = vst [vmem:[%s5 + $0x68] sm:$0xff] %v115
  %132 = vst [vmem:[%s5 + $0x70] sm:$0xff] %v116
  %133 = vst [vmem:[%s5 + $0x78] sm:$0xff] %v117
  %v134 = vld [vmem:[%s3] sm:$0xff]
  %v135 = vld [vmem:[%s3 + $0x8] sm:$0xff]
  %v136 = vld [vmem:[%s3 + $0x10] sm:$0xff]
  %v137 = vld [vmem:[%s3 + $0x18] sm:$0xff]
  %138 = vxpose.xlu0.b32.start [1/16] %v22, 128
  %139 = vxpose.xlu0.b32.cont [2/16] %v24, 128
  %140 = vxpose.xlu0.b32.cont [3/16] %v26, 128
  %141 = vxpose.xlu0.b32.cont [4/16] %v28, 128
  %142 = vxpose.xlu0.b32.cont [5/16] 0.0, 128
  %143 = vxpose.xlu0.b32.cont [6/16] 0.0, 128
  %144 = vxpose.xlu0.b32.cont [7/16] 0.0, 128
  %145 = vxpose.xlu0.b32.cont [8/16] 0.0, 128
  %146 = vxpose.xlu0.b32.cont [9/16] 0.0, 128
  %147 = vxpose.xlu0.b32.cont [10/16] 0.0, 128
  %148 = vxpose.xlu0.b32.cont [11/16] 0.0, 128
  %149 = vxpose.xlu0.b32.cont [12/16] 0.0, 128
  %150 = vxpose.xlu0.b32.cont [13/16] 0.0, 128
  %151 = vxpose.xlu0.b32.cont [14/16] 0.0, 128
  %152 = vxpose.xlu0.b32.cont [15/16] 0.0, 128
  %153 = vxpose.xlu0.b32.end [16/16] 0.0, 128
  %v154 = vpop.trf.xlu0
  %v155 = vpop.trf.xlu0
  %v156 = vpop.trf.xlu0
  %v157 = vpop.trf.xlu0
  %v158 = vpop.trf.xlu0
  %v159 = vpop.trf.xlu0
  %v160 = vpop.trf.xlu0
  %v161 = vpop.trf.xlu0
  %v162 = vpop.trf.xlu0
  %v163 = vpop.trf.xlu0
  %v164 = vpop.trf.xlu0
  %v165 = vpop.trf.xlu0
  %v166 = vpop.trf.xlu0
  %v167 = vpop.trf.xlu0
  %v168 = vpop.trf.xlu0
  %v169 = vpop.trf.xlu0
  %170 = vxpose.xlu0.b32.start [1/16] %v23, 128
  %171 = vxpose.xlu0.b32.cont [2/16] %v25, 128
  %172 = vxpose.xlu0.b32.cont [3/16] %v27, 128
  %173 = vxpose.xlu0.b32.cont [4/16] %v29, 128
  %174 = vxpose.xlu0.b32.cont [5/16] 0.0, 128
  %175 = vxpose.xlu0.b32.cont [6/16] 0.0, 128
  %176 = vxpose.xlu0.b32.cont [7/16] 0.0, 128
  %177 = vxpose.xlu0.b32.cont [8/16] 0.0, 128
  %178 = vxpose.xlu0.b32.cont [9/16] 0.0, 128
  %179 = vxpose.xlu0.b32.cont [10/16] 0.0, 128
  %180 = vxpose.xlu0.b32.cont [11/16] 0.0, 128
  %181 = vxpose.xlu0.b32.cont [12/16] 0.0, 128
  %182 = vxpose.xlu0.b32.cont [13/16] 0.0, 128
  %183 = vxpose.xlu0.b32.cont [14/16] 0.0, 128
  %184 = vxpose.xlu0.b32.cont [15/16] 0.0, 128
  %185 = vxpose.xlu0.b32.end [16/16] 0.0, 128
  %v186 = vpop.trf.xlu0
  %v187 = vpop.trf.xlu0
  %v188 = vpop.trf.xlu0
  %v189 = vpop.trf.xlu0
  %v190 = vpop.trf.xlu0
  %v191 = vpop.trf.xlu0
  %v192 = vpop.trf.xlu0
  %v193 = vpop.trf.xlu0
  %v194 = vpop.trf.xlu0
  %v195 = vpop.trf.xlu0
  %v196 = vpop.trf.xlu0
  %v197 = vpop.trf.xlu0
  %v198 = vpop.trf.xlu0
  %v199 = vpop.trf.xlu0
  %v200 = vpop.trf.xlu0
  %v201 = vpop.trf.xlu0
  %202 = vxpose.xlu0.b32.start [1/16] %v30, 128
  %203 = vxpose.xlu0.b32.cont [2/16] %v32, 128
  %204 = vxpose.xlu0.b32.cont [3/16] %v34, 128
  %205 = vxpose.xlu0.b32.cont [4/16] %v36, 128
  %206 = vxpose.xlu0.b32.cont [5/16] 0.0, 128
  %207 = vxpose.xlu0.b32.cont [6/16] 0.0, 128
  %208 = vxpose.xlu0.b32.cont [7/16] 0.0, 128
  %209 = vxpose.xlu0.b32.cont [8/16] 0.0, 128
  %210 = vxpose.xlu0.b32.cont [9/16] 0.0, 128
  %211 = vxpose.xlu0.b32.cont [10/16] 0.0, 128
  %212 = vxpose.xlu0.b32.cont [11/16] 0.0, 128
  %213 = vxpose.xlu0.b32.cont [12/16] 0.0, 128
  %214 = vxpose.xlu0.b32.cont [13/16] 0.0, 128
  %215 = vxpose.xlu0.b32.cont [14/16] 0.0, 128
  %216 = vxpose.xlu0.b32.cont [15/16] 0.0, 128
  %217 = vxpose.xlu0.b32.end [16/16] 0.0, 128
  %v218 = vpop.trf.xlu0
  %v219 = vpop.trf.xlu0
  %v220 = vpop.trf.xlu0
  %v221 = vpop.trf.xlu0
  %v222 = vpop.trf.xlu0
  %v223 = vpop.trf.xlu0
  %v224 = vpop.trf.xlu0
  %v225 = vpop.trf.xlu0
  %v226 = vpop.trf.xlu0
  %v227 = vpop.trf.xlu0
  %v228 = vpop.trf.xlu0
  %v229 = vpop.trf.xlu0
  %v230 = vpop.trf.xlu0
  %v231 = vpop.trf.xlu0
  %v232 = vpop.trf.xlu0
  %v233 = vpop.trf.xlu0
  %234 = vxpose.xlu0.b32.start [1/16] %v31, 128
  %235 = vxpose.xlu0.b32.cont [2/16] %v33, 128
  %236 = vxpose.xlu0.b32.cont [3/16] %v35, 128
  %237 = vxpose.xlu0.b32.cont [4/16] %v37, 128
  %238 = vxpose.xlu0.b32.cont [5/16] 0.0, 128
  %239 = vxpose.xlu0.b32.cont [6/16] 0.0, 128
  %240 = vxpose.xlu0.b32.cont [7/16] 0.0, 128
  %241 = vxpose.xlu0.b32.cont [8/16] 0.0, 128
  %242 = vxpose.xlu0.b32.cont [9/16] 0.0, 128
  %243 = vxpose.xlu0.b32.cont [10/16] 0.0, 128
  %244 = vxpose.xlu0.b32.cont [11/16] 0.0, 128
  %245 = vxpose.xlu0.b32.cont [12/16] 0.0, 128
  %246 = vxpose.xlu0.b32.cont [13/16] 0.0, 128
  %247 = vxpose.xlu0.b32.cont [14/16] 0.0, 128
  %248 = vxpose.xlu0.b32.cont [15/16] 0.0, 128
  %249 = vxpose.xlu0.b32.end [16/16] 0.0, 128
  %v250 = vpop.trf.xlu0
  %v251 = vpop.trf.xlu0
  %v252 = vpop.trf.xlu0
  %v253 = vpop.trf.xlu0
  %v254 = vpop.trf.xlu0
  %v255 = vpop.trf.xlu0
  %v256 = vpop.trf.xlu0
  %v257 = vpop.trf.xlu0
  %v258 = vpop.trf.xlu0
  %v259 = vpop.trf.xlu0
  %v260 = vpop.trf.xlu0
  %v261 = vpop.trf.xlu0
  %v262 = vpop.trf.xlu0
  %v263 = vpop.trf.xlu0
  %v264 = vpop.trf.xlu0
  %v265 = vpop.trf.xlu0
  %vm266 = vcmask 261120
  %v268 = vsel %vm266, %v154, 0
  %v271 = vsel %vm266, %v155, 0
  %v274 = vsel %vm266, %v156, 0
  %v277 = vsel %vm266, %v157, 0
  %v280 = vsel %vm266, %v158, 0
  %v283 = vsel %vm266, %v159, 0
  %v286 = vsel %vm266, %v160, 0
  %v289 = vsel %vm266, %v161, 0
  %v292 = vsel %vm266, %v162, 0
  %v295 = vsel %vm266, %v163, 0
  %v298 = vsel %vm266, %v164, 0
  %v301 = vsel %vm266, %v165, 0
  %v304 = vsel %vm266, %v166, 0
  %v307 = vsel %vm266, %v167, 0
  %v310 = vsel %vm266, %v168, 0
  %v313 = vsel %vm266, %v169, 0
  %v316 = vsel %vm266, %v186, 0
  %v319 = vsel %vm266, %v187, 0
  %v322 = vsel %vm266, %v188, 0
  %v325 = vsel %vm266, %v189, 0
  %v328 = vsel %vm266, %v190, 0
  %v331 = vsel %vm266, %v191, 0
  %v334 = vsel %vm266, %v192, 0
  %v337 = vsel %vm266, %v193, 0
  %v340 = vsel %vm266, %v194, 0
  %v343 = vsel %vm266, %v195, 0
  %v346 = vsel %vm266, %v196, 0
  %v349 = vsel %vm266, %v197, 0
  %v352 = vsel %vm266, %v198, 0
  %v355 = vsel %vm266, %v199, 0
  %v358 = vsel %vm266, %v200, 0
  %v361 = vsel %vm266, %v201, 0
  %v364 = vsel %vm266, %v218, 0
  %v367 = vsel %vm266, %v219, 0
  %v370 = vsel %vm266, %v220, 0
  %v373 = vsel %vm266, %v221, 0
  %v376 = vsel %vm266, %v222, 0
  %v379 = vsel %vm266, %v223, 0
  %v382 = vsel %vm266, %v224, 0
  %v385 = vsel %vm266, %v225, 0
  %v388 = vsel %vm266, %v226, 0
  %v391 = vsel %vm266, %v227, 0
  %v394 = vsel %vm266, %v228, 0
  %v397 = vsel %vm266, %v229, 0
  %v400 = vsel %vm266, %v230, 0
  %v403 = vsel %vm266, %v231, 0
  %v406 = vsel %vm266, %v232, 0
  %v409 = vsel %vm266, %v233, 0
  %v412 = vsel %vm266, %v250, 0
  %v415 = vsel %vm266, %v251, 0
  %v418 = vsel %vm266, %v252, 0
  %v421 = vsel %vm266, %v253, 0
  %v424 = vsel %vm266, %v254, 0
  %v427 = vsel %vm266, %v255, 0
  %v430 = vsel %vm266, %v256, 0
  %v433 = vsel %vm266, %v257, 0
  %v436 = vsel %vm266, %v258, 0
  %v439 = vsel %vm266, %v259, 0
  %v442 = vsel %vm266, %v260, 0
  %v445 = vsel %vm266, %v261, 0
  %v448 = vsel %vm266, %v262, 0
  %v451 = vsel %vm266, %v263, 0
  %v454 = vsel %vm266, %v264, 0
  %v457 = vsel %vm266, %v265, 0
  %v460 = vsel %vm266, %v134, 0
  %v463 = vsel %vm266, %v135, 0
  %v466 = vsel %vm266, %v136, 0
  %v469 = vsel %vm266, %v137, 0
  %471 = vmatpush.xpose.msra.mxu0 0.0
  %472 = vmatpush.xpose.msra.mxu0 0.0
  %473 = vmatpush.xpose.msra.mxu0 0.0
  %474 = vmatpush.xpose.msra.mxu0 0.0
  %475 = vmatpush.xpose.msra.mxu0 0.0
  %476 = vmatpush.xpose.msra.mxu0 0.0
  %477 = vmatpush.xpose.msra.mxu0 0.0
  %478 = vmatpush.xpose.msra.mxu0 0.0
  %479 = vmatpush.xpose.msra.mxu0 0.0
  %480 = vmatpush.xpose.msra.mxu0 0.0
  %481 = vmatpush.xpose.msra.mxu0 0.0
  %482 = vmatpush.xpose.msra.mxu0 0.0
  %483 = vmatpush.xpose.msra.mxu0 %v469
  %484 = vmatpush.xpose.msra.mxu0 %v466
  %485 = vmatpush.xpose.msra.mxu0 %v463
  %486 = vmatpush.xpose.msra.mxu0 %v460
  %487 = vmatmul.f32.gmra.mxu0 %v268
  %v488 = vpop.f32.mrf.mxu0
  %v489 = vadd.f32 0.0, %v488
  %490 = vmatmul.f32.gmra.mxu0 %v271
  %v491 = vpop.f32.mrf.mxu0
  %v492 = vadd.f32 0.0, %v491
  %493 = vmatmul.f32.gmra.mxu0 %v274
  %v494 = vpop.f32.mrf.mxu0
  %v495 = vadd.f32 0.0, %v494
  %496 = vmatmul.f32.gmra.mxu0 %v277
  %v497 = vpop.f32.mrf.mxu0
  %v498 = vadd.f32 0.0, %v497
  %499 = vmatmul.f32.gmra.mxu0 %v280
  %v500 = vpop.f32.mrf.mxu0
  %v501 = vadd.f32 0.0, %v500
  %502 = vmatmul.f32.gmra.mxu0 %v283
  %v503 = vpop.f32.mrf.mxu0
  %v504 = vadd.f32 0.0, %v503
  %505 = vmatmul.f32.gmra.mxu0 %v286
  %v506 = vpop.f32.mrf.mxu0
  %v507 = vadd.f32 0.0, %v506
  %508 = vmatmul.f32.gmra.mxu0 %v289
  %v509 = vpop.f32.mrf.mxu0
  %v510 = vadd.f32 0.0, %v509
  %511 = vmatmul.f32.gmra.mxu0 %v292
  %v512 = vpop.f32.mrf.mxu0
  %v513 = vadd.f32 0.0, %v512
  %514 = vmatmul.f32.gmra.mxu0 %v295
  %v515 = vpop.f32.mrf.mxu0
  %v516 = vadd.f32 0.0, %v515
  %517 = vmatmul.f32.gmra.mxu0 %v298
  %v518 = vpop.f32.mrf.mxu0
  %v519 = vadd.f32 0.0, %v518
  %520 = vmatmul.f32.gmra.mxu0 %v301
  %v521 = vpop.f32.mrf.mxu0
  %v522 = vadd.f32 0.0, %v521
  %523 = vmatmul.f32.gmra.mxu0 %v304
  %v524 = vpop.f32.mrf.mxu0
  %v525 = vadd.f32 0.0, %v524
  %526 = vmatmul.f32.gmra.mxu0 %v307
  %v527 = vpop.f32.mrf.mxu0
  %v528 = vadd.f32 0.0, %v527
  %529 = vmatmul.f32.gmra.mxu0 %v310
  %v530 = vpop.f32.mrf.mxu0
  %v531 = vadd.f32 0.0, %v530
  %532 = vmatmul.f32.gmra.mxu0 %v313
  %v533 = vpop.f32.mrf.mxu0
  %v534 = vadd.f32 0.0, %v533
  %535 = vmatmul.f32.gmra.mxu0 %v316
  %v536 = vpop.f32.mrf.mxu0
  %v537 = vadd.f32 0.0, %v536
  %538 = vmatmul.f32.gmra.mxu0 %v319
  %v539 = vpop.f32.mrf.mxu0
  %v540 = vadd.f32 0.0, %v539
  %541 = vmatmul.f32.gmra.mxu0 %v322
  %v542 = vpop.f32.mrf.mxu0
  %v543 = vadd.f32 0.0, %v542
  %544 = vmatmul.f32.gmra.mxu0 %v325
  %v545 = vpop.f32.mrf.mxu0
  %v546 = vadd.f32 0.0, %v545
  %547 = vmatmul.f32.gmra.mxu0 %v328
  %v548 = vpop.f32.mrf.mxu0
  %v549 = vadd.f32 0.0, %v548
  %550 = vmatmul.f32.gmra.mxu0 %v331
  %v551 = vpop.f32.mrf.mxu0
  %v552 = vadd.f32 0.0, %v551
  %553 = vmatmul.f32.gmra.mxu0 %v334
  %v554 = vpop.f32.mrf.mxu0
  %v555 = vadd.f32 0.0, %v554
  %556 = vmatmul.f32.gmra.mxu0 %v337
  %v557 = vpop.f32.mrf.mxu0
  %v558 = vadd.f32 0.0, %v557
  %559 = vmatmul.f32.gmra.mxu0 %v340
  %v560 = vpop.f32.mrf.mxu0
  %v561 = vadd.f32 0.0, %v560
  %562 = vmatmul.f32.gmra.mxu0 %v343
  %v563 = vpop.f32.mrf.mxu0
  %v564 = vadd.f32 0.0, %v563
  %565 = vmatmul.f32.gmra.mxu0 %v346
  %v566 = vpop.f32.mrf.mxu0
  %v567 = vadd.f32 0.0, %v566
  %568 = vmatmul.f32.gmra.mxu0 %v349
  %v569 = vpop.f32.mrf.mxu0
  %v570 = vadd.f32 0.0, %v569
  %571 = vmatmul.f32.gmra.mxu0 %v352
  %v572 = vpop.f32.mrf.mxu0
  %v573 = vadd.f32 0.0, %v572
  %574 = vmatmul.f32.gmra.mxu0 %v355
  %v575 = vpop.f32.mrf.mxu0
  %v576 = vadd.f32 0.0, %v575
  %577 = vmatmul.f32.gmra.mxu0 %v358
  %v578 = vpop.f32.mrf.mxu0
  %v579 = vadd.f32 0.0, %v578
  %580 = vmatmul.f32.gmra.mxu0 %v361
  %v581 = vpop.f32.mrf.mxu0
  %v582 = vadd.f32 0.0, %v581
  %583 = vmatmul.f32.gmra.mxu0 %v364
  %v584 = vpop.f32.mrf.mxu0
  %v585 = vadd.f32 0.0, %v584
  %586 = vmatmul.f32.gmra.mxu0 %v367
  %v587 = vpop.f32.mrf.mxu0
  %v588 = vadd.f32 0.0, %v587
  %589 = vmatmul.f32.gmra.mxu0 %v370
  %v590 = vpop.f32.mrf.mxu0
  %v591 = vadd.f32 0.0, %v590
  %592 = vmatmul.f32.gmra.mxu0 %v373
  %v593 = vpop.f32.mrf.mxu0
  %v594 = vadd.f32 0.0, %v593
  %595 = vmatmul.f32.gmra.mxu0 %v376
  %v596 = vpop.f32.mrf.mxu0
  %v597 = vadd.f32 0.0, %v596
  %598 = vmatmul.f32.gmra.mxu0 %v379
  %v599 = vpop.f32.mrf.mxu0
  %v600 = vadd.f32 0.0, %v599
  %601 = vmatmul.f32.gmra.mxu0 %v382
  %v602 = vpop.f32.mrf.mxu0
  %v603 = vadd.f32 0.0, %v602
  %604 = vmatmul.f32.gmra.mxu0 %v385
  %v605 = vpop.f32.mrf.mxu0
  %v606 = vadd.f32 0.0, %v605
  %607 = vmatmul.f32.gmra.mxu0 %v388
  %v608 = vpop.f32.mrf.mxu0
  %v609 = vadd.f32 0.0, %v608
  %610 = vmatmul.f32.gmra.mxu0 %v391
  %v611 = vpop.f32.mrf.mxu0
  %v612 = vadd.f32 0.0, %v611
  %613 = vmatmul.f32.gmra.mxu0 %v394
  %v614 = vpop.f32.mrf.mxu0
  %v615 = vadd.f32 0.0, %v614
  %616 = vmatmul.f32.gmra.mxu0 %v397
  %v617 = vpop.f32.mrf.mxu0
  %v618 = vadd.f32 0.0, %v617
  %619 = vmatmul.f32.gmra.mxu0 %v400
  %v620 = vpop.f32.mrf.mxu0
  %v621 = vadd.f32 0.0, %v620
  %622 = vmatmul.f32.gmra.mxu0 %v403
  %v623 = vpop.f32.mrf.mxu0
  %v624 = vadd.f32 0.0, %v623
  %625 = vmatmul.f32.gmra.mxu0 %v406
  %v626 = vpop.f32.mrf.mxu0
  %v627 = vadd.f32 0.0, %v626
  %628 = vmatmul.f32.gmra.mxu0 %v409
  %v629 = vpop.f32.mrf.mxu0
  %v630 = vadd.f32 0.0, %v629
  %631 = vmatmul.f32.gmra.mxu0 %v412
  %v632 = vpop.f32.mrf.mxu0
  %v633 = vadd.f32 0.0, %v632
  %634 = vmatmul.f32.gmra.mxu0 %v415
  %v635 = vpop.f32.mrf.mxu0
  %v636 = vadd.f32 0.0, %v635
  %637 = vmatmul.f32.gmra.mxu0 %v418
  %v638 = vpop.f32.mrf.mxu0
  %v639 = vadd.f32 0.0, %v638
  %640 = vmatmul.f32.gmra.mxu0 %v421
  %v641 = vpop.f32.mrf.mxu0
  %v642 = vadd.f32 0.0, %v641
  %643 = vmatmul.f32.gmra.mxu0 %v424
  %v644 = vpop.f32.mrf.mxu0
  %v645 = vadd.f32 0.0, %v644
  %646 = vmatmul.f32.gmra.mxu0 %v427
  %v647 = vpop.f32.mrf.mxu0
  %v648 = vadd.f32 0.0, %v647
  %649 = vmatmul.f32.gmra.mxu0 %v430
  %v650 = vpop.f32.mrf.mxu0
  %v651 = vadd.f32 0.0, %v650
  %652 = vmatmul.f32.gmra.mxu0 %v433
  %v653 = vpop.f32.mrf.mxu0
  %v654 = vadd.f32 0.0, %v653
  %655 = vmatmul.f32.gmra.mxu0 %v436
  %v656 = vpop.f32.mrf.mxu0
  %v657 = vadd.f32 0.0, %v656
  %658 = vmatmul.f32.gmra.mxu0 %v439
  %v659 = vpop.f32.mrf.mxu0
  %v660 = vadd.f32 0.0, %v659
  %661 = vmatmul.f32.gmra.mxu0 %v442
  %v662 = vpop.f32.mrf.mxu0
  %v663 = vadd.f32 0.0, %v662
  %664 = vmatmul.f32.gmra.mxu0 %v445
  %v665 = vpop.f32.mrf.mxu0
  %v666 = vadd.f32 0.0, %v665
  %667 = vmatmul.f32.gmra.mxu0 %v448
  %v668 = vpop.f32.mrf.mxu0
  %v669 = vadd.f32 0.0, %v668
  %670 = vmatmul.f32.gmra.mxu0 %v451
  %v671 = vpop.f32.mrf.mxu0
  %v672 = vadd.f32 0.0, %v671
  %673 = vmatmul.f32.gmra.mxu0 %v454
  %v674 = vpop.f32.mrf.mxu0
  %v675 = vadd.f32 0.0, %v674
  %676 = vmatmul.f32.gmra.mxu0 %v457
  %v677 = vpop.f32.mrf.mxu0
  %v678 = vadd.f32 0.0, %v677
  %679 = vdwg.mxu0
  %680 = vxpose.xlu0.b32.start [1/16] %v489, 128
  %681 = vxpose.xlu0.b32.cont [2/16] %v492, 128
  %682 = vxpose.xlu0.b32.cont [3/16] %v495, 128
  %683 = vxpose.xlu0.b32.cont [4/16] %v498, 128
  %684 = vxpose.xlu0.b32.cont [5/16] %v501, 128
  %685 = vxpose.xlu0.b32.cont [6/16] %v504, 128
  %686 = vxpose.xlu0.b32.cont [7/16] %v507, 128
  %687 = vxpose.xlu0.b32.cont [8/16] %v510, 128
  %688 = vxpose.xlu0.b32.cont [9/16] %v513, 128
  %689 = vxpose.xlu0.b32.cont [10/16] %v516, 128
  %690 = vxpose.xlu0.b32.cont [11/16] %v519, 128
  %691 = vxpose.xlu0.b32.cont [12/16] %v522, 128
  %692 = vxpose.xlu0.b32.cont [13/16] %v525, 128
  %693 = vxpose.xlu0.b32.cont [14/16] %v528, 128
  %694 = vxpose.xlu0.b32.cont [15/16] %v531, 128
  %695 = vxpose.xlu0.b32.end [16/16] %v534, 128
  %v696 = vpop.trf.xlu0
  %v697 = vpop.trf.xlu0
  %v698 = vpop.trf.xlu0
  %v699 = vpop.trf.xlu0
  %v700 = vpop.trf.xlu0
  %v701 = vpop.trf.xlu0
  %v702 = vpop.trf.xlu0
  %v703 = vpop.trf.xlu0
  %v704 = vpop.trf.xlu0
  %v705 = vpop.trf.xlu0
  %v706 = vpop.trf.xlu0
  %v707 = vpop.trf.xlu0
  %v708 = vpop.trf.xlu0
  %v709 = vpop.trf.xlu0
  %v710 = vpop.trf.xlu0
  %v711 = vpop.trf.xlu0
  %712 = vxpose.xlu0.b32.start [1/16] %v537, 128
  %713 = vxpose.xlu0.b32.cont [2/16] %v540, 128
  %714 = vxpose.xlu0.b32.cont [3/16] %v543, 128
  %715 = vxpose.xlu0.b32.cont [4/16] %v546, 128
  %716 = vxpose.xlu0.b32.cont [5/16] %v549, 128
  %717 = vxpose.xlu0.b32.cont [6/16] %v552, 128
  %718 = vxpose.xlu0.b32.cont [7/16] %v555, 128
  %719 = vxpose.xlu0.b32.cont [8/16] %v558, 128
  %720 = vxpose.xlu0.b32.cont [9/16] %v561, 128
  %721 = vxpose.xlu0.b32.cont [10/16] %v564, 128
  %722 = vxpose.xlu0.b32.cont [11/16] %v567, 128
  %723 = vxpose.xlu0.b32.cont [12/16] %v570, 128
  %724 = vxpose.xlu0.b32.cont [13/16] %v573, 128
  %725 = vxpose.xlu0.b32.cont [14/16] %v576, 128
  %726 = vxpose.xlu0.b32.cont [15/16] %v579, 128
  %727 = vxpose.xlu0.b32.end [16/16] %v582, 128
  %v728 = vpop.trf.xlu0
  %v729 = vpop.trf.xlu0
  %v730 = vpop.trf.xlu0
  %v731 = vpop.trf.xlu0
  %v732 = vpop.trf.xlu0
  %v733 = vpop.trf.xlu0
  %v734 = vpop.trf.xlu0
  %v735 = vpop.trf.xlu0
  %v736 = vpop.trf.xlu0
  %v737 = vpop.trf.xlu0
  %v738 = vpop.trf.xlu0
  %v739 = vpop.trf.xlu0
  %v740 = vpop.trf.xlu0
  %v741 = vpop.trf.xlu0
  %v742 = vpop.trf.xlu0
  %v743 = vpop.trf.xlu0
  %744 = vxpose.xlu0.b32.start [1/16] %v585, 128
  %745 = vxpose.xlu0.b32.cont [2/16] %v588, 128
  %746 = vxpose.xlu0.b32.cont [3/16] %v591, 128
  %747 = vxpose.xlu0.b32.cont [4/16] %v594, 128
  %748 = vxpose.xlu0.b32.cont [5/16] %v597, 128
  %749 = vxpose.xlu0.b32.cont [6/16] %v600, 128
  %750 = vxpose.xlu0.b32.cont [7/16] %v603, 128
  %751 = vxpose.xlu0.b32.cont [8/16] %v606, 128
  %752 = vxpose.xlu0.b32.cont [9/16] %v609, 128
  %753 = vxpose.xlu0.b32.cont [10/16] %v612, 128
  %754 = vxpose.xlu0.b32.cont [11/16] %v615, 128
  %755 = vxpose.xlu0.b32.cont [12/16] %v618, 128
  %756 = vxpose.xlu0.b32.cont [13/16] %v621, 128
  %757 = vxpose.xlu0.b32.cont [14/16] %v624, 128
  %758 = vxpose.xlu0.b32.cont [15/16] %v627, 128
  %759 = vxpose.xlu0.b32.end [16/16] %v630, 128
  %v760 = vpop.trf.xlu0
  %v761 = vpop.trf.xlu0
  %v762 = vpop.trf.xlu0
  %v763 = vpop.trf.xlu0
  %v764 = vpop.trf.xlu0
  %v765 = vpop.trf.xlu0
  %v766 = vpop.trf.xlu0
  %v767 = vpop.trf.xlu0
  %v768 = vpop.trf.xlu0
  %v769 = vpop.trf.xlu0
  %v770 = vpop.trf.xlu0
  %v771 = vpop.trf.xlu0
  %v772 = vpop.trf.xlu0
  %v773 = vpop.trf.xlu0
  %v774 = vpop.trf.xlu0
  %v775 = vpop.trf.xlu0
  %776 = vxpose.xlu0.b32.start [1/16] %v633, 128
  %777 = vxpose.xlu0.b32.cont [2/16] %v636, 128
  %778 = vxpose.xlu0.b32.cont [3/16] %v639, 128
  %779 = vxpose.xlu0.b32.cont [4/16] %v642, 128
  %780 = vxpose.xlu0.b32.cont [5/16] %v645, 128
  %781 = vxpose.xlu0.b32.cont [6/16] %v648, 128
  %782 = vxpose.xlu0.b32.cont [7/16] %v651, 128
  %783 = vxpose.xlu0.b32.cont [8/16] %v654, 128
  %784 = vxpose.xlu0.b32.cont [9/16] %v657, 128
  %785 = vxpose.xlu0.b32.cont [10/16] %v660, 128
  %786 = vxpose.xlu0.b32.cont [11/16] %v663, 128
  %787 = vxpose.xlu0.b32.cont [12/16] %v666, 128
  %788 = vxpose.xlu0.b32.cont [13/16] %v669, 128
  %789 = vxpose.xlu0.b32.cont [14/16] %v672, 128
  %790 = vxpose.xlu0.b32.cont [15/16] %v675, 128
  %791 = vxpose.xlu0.b32.end [16/16] %v678, 128
  %v792 = vpop.trf.xlu0
  %v793 = vpop.trf.xlu0
  %v794 = vpop.trf.xlu0
  %v795 = vpop.trf.xlu0
  %v796 = vpop.trf.xlu0
  %v797 = vpop.trf.xlu0
  %v798 = vpop.trf.xlu0
  %v799 = vpop.trf.xlu0
  %v800 = vpop.trf.xlu0
  %v801 = vpop.trf.xlu0
  %v802 = vpop.trf.xlu0
  %v803 = vpop.trf.xlu0
  %v804 = vpop.trf.xlu0
  %v805 = vpop.trf.xlu0
  %v806 = vpop.trf.xlu0
  %v807 = vpop.trf.xlu0
  %v808 = vld [vmem:[%s4] sm:$0xff]
  %v809 = vld [vmem:[%s4 + $0x8] sm:$0xff]
  %v810 = vld [vmem:[%s4 + $0x10] sm:$0xff]
  %v811 = vld [vmem:[%s4 + $0x18] sm:$0xff]
  %813 = vset.pattern.permute.xlu0 0
  %814 = vperm.xlu0 %813, %v808
  %v815 = vpop.permute.xlu0 %814
  %818 = vset.pattern.permute.xlu0 0
  %819 = vperm.xlu0 %818, %v809
  %v820 = vpop.permute.xlu0 %819
  %823 = vset.pattern.permute.xlu0 0
  %824 = vperm.xlu0 %823, %v810
  %v825 = vpop.permute.xlu0 %824
  %828 = vset.pattern.permute.xlu0 0
  %829 = vperm.xlu0 %828, %v811
  %v830 = vpop.permute.xlu0 %829
  %v832 = vadd.f32 %v696, %v815
  %v833 = vadd.f32 %v728, %v815
  %v834 = vadd.f32 %v697, %v820
  %v835 = vadd.f32 %v729, %v820
  %v836 = vadd.f32 %v698, %v825
  %v837 = vadd.f32 %v730, %v825
  %v838 = vadd.f32 %v699, %v830
  %v839 = vadd.f32 %v731, %v830
  %v840 = vadd.f32 %v760, %v815
  %v841 = vadd.f32 %v792, %v815
  %v842 = vadd.f32 %v761, %v820
  %v843 = vadd.f32 %v793, %v820
  %v844 = vadd.f32 %v762, %v825
  %v845 = vadd.f32 %v794, %v825
  %v846 = vadd.f32 %v763, %v830
  %v847 = vadd.f32 %v795, %v830
  %848 = vst [vmem:[%s6] sm:$0xff] %v832
  %849 = vst [vmem:[%s6 + $0x8] sm:$0xff] %v833
  %850 = vst [vmem:[%s6 + $0x10] sm:$0xff] %v834
  %851 = vst [vmem:[%s6 + $0x18] sm:$0xff] %v835
  %852 = vst [vmem:[%s6 + $0x20] sm:$0xff] %v836
  %853 = vst [vmem:[%s6 + $0x28] sm:$0xff] %v837
  %854 = vst [vmem:[%s6 + $0x30] sm:$0xff] %v838
  %855 = vst [vmem:[%s6 + $0x38] sm:$0xff] %v839
  %856 = vst [vmem:[%s6 + $0x40] sm:$0xff] %v840
  %857 = vst [vmem:[%s6 + $0x48] sm:$0xff] %v841
  %858 = vst [vmem:[%s6 + $0x50] sm:$0xff] %v842
  %859 = vst [vmem:[%s6 + $0x58] sm:$0xff] %v843
  %860 = vst [vmem:[%s6 + $0x60] sm:$0xff] %v844
  %861 = vst [vmem:[%s6 + $0x68] sm:$0xff] %v845
  %862 = vst [vmem:[%s6 + $0x70] sm:$0xff] %v846
  %863 = vst [vmem:[%s6 + $0x78] sm:$0xff] %v847
  // Predicated region
  $region22: #{fused_bn_input_proj.1} parent=0 // pred_check
    _
  $region23: #{fused_bn_input_proj.1} parent=0 // pred_check_branch
    %865 = sbr.rel (0) target = $region25
  $region24: #{fused_bn_input_proj.1} parent=0 // pred_region
    _
  $region25: #{fused_bn_input_proj.1} parent=0 // pred_fallthru
    _
  // Predicated region
  $region26: #{fused_bn_input_proj.1} parent=0 // pred_check
    _
  $region27: #{fused_bn_input_proj.1} parent=0 // pred_check_branch
    %867 = sbr.rel (0) target = $region29
  $region28: #{fused_bn_input_proj.1} parent=0 // pred_region
    _
  $region29: #{fused_bn_input_proj.1} parent=0 // pred_fallthru
    _
  // Predicated region
  $region30: #{fused_bn_input_proj.1} parent=0 // pred_check
    _
  $region31: #{fused_bn_input_proj.1} parent=0 // pred_check_branch
    %869 = sbr.rel (0) target = $region33
  $region32: #{fused_bn_input_proj.1} parent=0 // pred_region
    _
  $region33: #{fused_bn_input_proj.1} parent=0 // pred_fallthru
    _
  // Predicated region
  $region34: #{fused_bn_input_proj.1} parent=0 // pred_check
    _
  $region35: #{fused_bn_input_proj.1} parent=0 // pred_check_branch
    %871 = sbr.rel (0) target = $region37
  $region36: #{fused_bn_input_proj.1} parent=0 // pred_region
    _
  $region37: #{fused_bn_input_proj.1} parent=0 // pred_fallthru
    _

</llo_original>
